<compile_context>
chip_gen: v6e
topology: v6e:2x2x1
jax: 0.10.0
libtpu: 0.0.40
codegen_flags: <defaults>
</compile_context>

<pallas_src>
import functools

import jax
import jax.numpy as jnp
from jax.experimental import pallas as pl
from jax.experimental.pallas import tpu as pltpu

_LANES = 128


# ----------------------------- math helpers (shared) -----------------------------

def _bce_with_logits(x, t):
    # Numerically stable BCE-with-logits, reduction='none', f32.
    return jnp.maximum(x, 0.0) - x * t + jnp.log1p(jnp.exp(-jnp.abs(x)))


def _focal_from_bce(bce, gamma):
    """loss = bce * (1.000001 - exp(-bce)) ** gamma, with cheap gamma special cases."""
    base = 1.000001 - jnp.exp(-bce)
    g = float(gamma)
    if g == 0.0:
        return bce
    if g == 0.5:
        return bce * jnp.sqrt(base)
    if g.is_integer() and 1.0 <= g <= 8.0:
        mod = base
        for _ in range(int(g) - 1):          # VPU multiplies instead of exp/log pow
            mod = mod * base
        return bce * mod
    return bce * (base ** g)                  # generic exponent -> EUP exp/log


# ----------------------------------- kernel --------------------------------------

def _focal_bce_kernel(x_ref, t_ref, part_ref, *, gamma):
    @pl.when(pl.program_id(1) == 0)
    def _():
        part_ref[...] = jnp.zeros_like(part_ref)

    x = x_ref[...].astype(jnp.float32)        # cast in-register (no wrapper upcast)
    t = t_ref[...].astype(jnp.float32)
    loss = _focal_from_bce(_bce_with_logits(x, t), gamma)

    # Fold the (tile_rows, 128) tile into the per-core (8, 128) accumulator with plain
    # vector adds; the single cross-lane reduction happens once, outside the kernel.
    part_ref[...] += loss.reshape(-1, 8, _LANES).sum(axis=0)


# ---------------------------------- wrapper ---------------------------------------

def _device_kind():
    try:
        return jax.devices()[0].device_kind.lower()
    except Exception:
        return ""


def _default_num_cores(kind):
    # 2 TensorCores per chip on v4 / v5p / v7x; 1 on v2/v3/v5e/v6e.
    return 2 if any(s in kind for s in ("v4", "v5p", "v7", "tpu7")) else 1


def _default_tile_rows(kind):
    # v5e default scoped VMEM is 16 MiB -> 4096-row f32 tiles (8 MiB double-buffered
    # for two inputs); v6e/v7x default scoped slice is 32 MiB -> 8192 rows (16 MiB).
    if "v5e" in kind or "v5 lite" in kind or "v5litepod" in kind:
        return 4096
    return 8192


def _sublane(dtype):
    return 8 * max(1, 4 // jnp.dtype(dtype).itemsize)


def focal_loss(input, target, *, gamma=0.5, alpha=1.0, reduction="mean",
               tile_rows=None, num_cores=None):
    """Focal loss over BCE-with-logits. input/target: same shape, any rank."""
    if reduction not in ("mean", "sum"):
        # TODO(synk): reduction='none' (per-element loss output) not implemented.
        raise NotImplementedError("reduction must be 'mean' or 'sum'")
    # TODO(synk): arbitrary user-supplied loss_fcn is not representable; the canonical
    # BCEWithLogitsLoss inner loss is implemented here.

    x = jnp.asarray(input)
    t = jnp.asarray(target)
    if not jnp.issubdtype(x.dtype, jnp.floating):
        x = x.astype(jnp.float32)
    if not jnp.issubdtype(t.dtype, jnp.floating):
        t = t.astype(jnp.float32)

    total = int(x.size)
    x = x.reshape(-1)
    t = t.reshape(-1)

    kind = _device_kind()
    if num_cores is None:
        num_cores = _default_num_cores(kind)
    if tile_rows is None:
        tile_rows = _default_tile_rows(kind)

    sub = max(_sublane(x.dtype), _sublane(t.dtype))   # 8 rows f32, 16 bf16/f16
    rows_full = total // _LANES
    if rows_full < num_cores * sub:
        num_cores = 1

    total_sum = jnp.float32(0.0)
    bulk = 0

    if rows_full >= sub:
        # Exactly-tileable prefix: num_cores * tiles_per_core * tr rows (no padding,
        # no in-kernel mask).  For aligned inputs this covers everything, zero-copy.
        rows_per_core = (rows_full // num_cores) // sub * sub
        max_tile = max((int(tile_rows) // sub) * sub, sub)
        tiles_per_core = max(pl.cdiv(rows_per_core, max_tile), 1)
        tr = (rows_per_core // tiles_per_core) // sub * sub
        kernel_rows = num_cores * tiles_per_core * tr
        bulk = kernel_rows * _LANES

        xb = (x if bulk == total else x[:bulk]).reshape(kernel_rows, _LANES)
        tb = (t if bulk == total else t[:bulk]).reshape(kernel_rows, _LANES)

        kernel = functools.partial(_focal_bce_kernel, gamma=float(gamma))
        in_map = lambda c, i: (c * tiles_per_core + i, 0)

        partials = pl.pallas_call(
            kernel,
            out_shape=jax.ShapeDtypeStruct((num_cores * 8, _LANES), jnp.float32),
            grid_spec=pltpu.PrefetchScalarGridSpec(
                num_scalar_prefetch=0,
                grid=(num_cores, tiles_per_core),
                in_specs=[
                    pl.BlockSpec((tr, _LANES), in_map),
                    pl.BlockSpec((tr, _LANES), in_map),
                ],
                out_specs=pl.BlockSpec((8, _LANES), lambda c, i: (c, 0)),
            ),
            # If a v7x profile shows one TC idle, switch the first axis to
            # pltpu.CORE_PARALLEL; "parallel" is the documented megacore sharding knob.
            compiler_params=pltpu.CompilerParams(
                dimension_semantics=("parallel", "arbitrary")),
        )(xb, tb)

        total_sum = jnp.sum(partials)   # single tiny cross-lane reduce

    if bulk < total:
        # Tiny remainder (a few rows + <128 elements, or the whole input if it is
        # smaller than one (8,128) block): pure-JAX epilogue, one fused pass.
        tx = x[bulk:].astype(jnp.float32)
        tt = t[bulk:].astype(jnp.float32)
        total_sum = total_sum + jnp.sum(_focal_from_bce(_bce_with_logits(tx, tt), gamma))

    s = total_sum * alpha
    if reduction == "mean":
        return s / total
    return s


# --------------------------------- reference --------------------------------------

def _focal_loss_ref(x, t, gamma=0.5, alpha=1.0, reduction="mean"):
    """Pure-JAX reference mirroring the PyTorch forward (BCEWithLogits inner loss)."""
    x = x.astype(jnp.float32)
    t = t.astype(jnp.float32)
    bce = jnp.maximum(x, 0.0) - x * t + jnp.log1p(jnp.exp(-jnp.abs(x)))
    loss = bce * (alpha * (1.000001 - jnp.exp(-bce)) ** gamma)
    if reduction == "mean":
        return loss.mean()
    if reduction == "sum":
        return loss.sum()
    return loss


if __name__ == "__main__":
    key = jax.random.PRNGKey(0)
    k1, k2 = jax.random.split(key)

    # batch=2, channels=4, 16x16 spatial logits + binary targets
    shape = (2, 4, 16, 16)
    logits = jax.random.normal(k1, shape, dtype=jnp.float32) * 2.0
    target = (jax.random.uniform(k2, shape) > 0.5).astype(jnp.float32)

    out_mean = jax.block_until_ready(focal_loss(logits, target))
    out_sum = jax.block_until_ready(focal_loss(logits, target, reduction="sum"))
    out_g2 = jax.block_until_ready(focal_loss(logits, target, gamma=2.0, reduction="sum"))

    ref_mean = _focal_loss_ref(logits, target)
    ref_sum = _focal_loss_ref(logits, target, reduction="sum")
    ref_g2 = _focal_loss_ref(logits, target, gamma=2.0, reduction="sum")

    assert jnp.allclose(out_mean, ref_mean, rtol=1e-5, atol=1e-6), (out_mean, ref_mean)
    assert jnp.allclose(out_sum, ref_sum, rtol=1e-5, atol=1e-3), (out_sum, ref_sum)
    assert jnp.allclose(out_g2, ref_g2, rtol=1e-5, atol=1e-3), (out_g2, ref_g2)

    print("KERNEL_OK")
</pallas_src>

<mosaic_0001>
module attributes {stable_mosaic.version = 11 : i64} {
  func.func @_focal_bce_kernel(%arg0: i32, %arg1: i32, %arg2: memref<16x128xf32, #tpu.memory_space<vmem>>, %arg3: memref<16x128xf32, #tpu.memory_space<vmem>>, %arg4: memref<8x128xf32, #tpu.memory_space<vmem>>) attributes {dimension_semantics = [#tpu.dimension_semantics<parallel>, #tpu.dimension_semantics<arbitrary>], iteration_bounds = array<i64: 1, 1>, scalar_prefetch = 0 : i64, scratch_operands = 0 : i64, tpu.core_type = #tpu.core_type<tc>, window_params = [{transform_indices = @transform_0, window_bounds = array<i64: 16, 128>}, {transform_indices = @transform_1, window_bounds = array<i64: 16, 128>}, {transform_indices = @transform_2, window_bounds = array<i64: 8, 128>}]} {
    %c0_i32 = arith.constant 0 : i32
    %0 = arith.cmpi eq, %arg1, %c0_i32 : i32
    %1 = arith.extui %0 : i1 to i32
    %c0_i32_0 = arith.constant 0 : i32
    %2 = arith.cmpi ne, %1, %c0_i32_0 : i32
    scf.if %2 {
      %cst_12 = arith.constant 0.000000e+00 : f32
      %27 = vector.broadcast %cst_12 : f32 to vector<8x128xf32>
      %c0_13 = arith.constant 0 : index
      %c0_14 = arith.constant 0 : index
      %28 = vector.load %arg4[%c0_13, %c0_14] : memref<8x128xf32, #tpu.memory_space<vmem>>, vector<8x128xf32>
      tpu.vector_store %arg4[%c0_13, %c0_14], %27 {strides = array<i32>} : memref<8x128xf32, #tpu.memory_space<vmem>>, vector<8x128xf32>,
    } else {
    }
    %c0 = arith.constant 0 : index
    %c0_1 = arith.constant 0 : index
    %3 = vector.load %arg2[%c0, %c0_1] : memref<16x128xf32, #tpu.memory_space<vmem>>, vector<16x128xf32>
    %c0_2 = arith.constant 0 : index
    %c0_3 = arith.constant 0 : index
    %4 = vector.load %arg3[%c0_2, %c0_3] : memref<16x128xf32, #tpu.memory_space<vmem>>, vector<16x128xf32>
    %cst = arith.constant 0.000000e+00 : f32
    %5 = vector.broadcast %cst : f32 to vector<16x128xf32>
    %6 = arith.maximumf %3, %5 : vector<16x128xf32>
    %7 = arith.mulf %3, %4 : vector<16x128xf32>
    %8 = arith.subf %6, %7 : vector<16x128xf32>
    %9 = math.absf %3 : vector<16x128xf32>
    %cst_4 = arith.constant 0.000000e+00 : f32
    %10 = vector.broadcast %cst_4 : f32 to vector<16x128xf32>
    %11 = arith.subf %10, %9 : vector<16x128xf32>
    %12 = math.exp %11 : vector<16x128xf32>
    %13 = math.log1p %12 : vector<16x128xf32>
    %14 = arith.addf %8, %13 : vector<16x128xf32>
    %cst_5 = arith.constant 0.000000e+00 : f32
    %15 = vector.broadcast %cst_5 : f32 to vector<16x128xf32>
    %16 = arith.subf %15, %14 : vector<16x128xf32>
    %17 = math.exp %16 : vector<16x128xf32>
    %cst_6 = arith.constant 1.00000095 : f32
    %18 = vector.broadcast %cst_6 : f32 to vector<16x128xf32>
    %19 = arith.subf %18, %17 : vector<16x128xf32>
    %20 = math.sqrt %19 : vector<16x128xf32>
    %21 = arith.mulf %14, %20 : vector<16x128xf32>
    %c0_7 = arith.constant 0 : index
    %c0_8 = arith.constant 0 : index
    %22 = vector.load %arg4[%c0_7, %c0_8] : memref<8x128xf32, #tpu.memory_space<vmem>>, vector<8x128xf32>
    %23 = vector.shape_cast %21 : vector<16x128xf32> to vector<2x8x128xf32>
    %cst_9 = arith.constant dense<0.000000e+00> : vector<8x128xf32>
    %24 = vector.multi_reduction <add>, %23, %cst_9 [0] : vector<2x8x128xf32> to vector<8x128xf32>
    %25 = arith.addf %22, %24 : vector<8x128xf32>
    %c0_10 = arith.constant 0 : index
    %c0_11 = arith.constant 0 : index
    %26 = vector.load %arg4[%c0_10, %c0_11] : memref<8x128xf32, #tpu.memory_space<vmem>>, vector<8x128xf32>
    tpu.vector_store %arg4[%c0_10, %c0_11], %25 {strides = array<i32>} : memref<8x128xf32, #tpu.memory_space<vmem>>, vector<8x128xf32>,
    return
  }
  func.func @transform_0(%arg0: i32, %arg1: i32) -> (i32, i32) {
    %c1_i32 = arith.constant 1 : i32
    %0 = arith.muli %arg0, %c1_i32 : i32
    %1 = arith.addi %0, %arg1 : i32
    %c0_i32 = arith.constant 0 : i32
    %c0_i32_0 = arith.constant 0 : i32
    return %1, %c0_i32 : i32, i32
  }
  func.func @transform_1(%arg0: i32, %arg1: i32) -> (i32, i32) {
    %c1_i32 = arith.constant 1 : i32
    %0 = arith.muli %arg0, %c1_i32 : i32
    %1 = arith.addi %0, %arg1 : i32
    %c0_i32 = arith.constant 0 : i32
    %c0_i32_0 = arith.constant 0 : i32
    return %1, %c0_i32 : i32, i32
  }
  func.func @transform_2(%arg0: i32, %arg1: i32) -> (i32, i32) {
    %c0_i32 = arith.constant 0 : i32
    %c0_i32_0 = arith.constant 0 : i32
    return %arg0, %c0_i32 : i32, i32
  }
}

</mosaic_0001>

<llo_original>
// kernel: tpu_custom_call.1
$region0: #{tpu_custom_call.1}
  #allocation0 [shape = 'u32[]', space=smem, size = 0x4, offset = 0x4, fixed_abs, tag = 'smem constant byte address 0x4 - core index']
  #allocation1 [shape = 'u32[144,128]{1,0:T(1,128)}', space=vmem, size = 0x12000, scoped, tag = 'internal scratch']
  %s0 = inlined_call_operand.hbm [shape: f32[16,128], index: 0, kind: input, shape index: {}]
  %s1 = inlined_call_operand.hbm [shape: f32[16,128], index: 1, kind: input, shape index: {}]
  %s2 = inlined_call_operand.hbm [shape: f32[8,128], index: 2, kind: output, shape index: {}]
  %s3 = sld [smem:[#allocation0]]
  $region30: #{tpu_custom_call.1} parent=0
    _
  %s5 = ssub.s32 1, %s3
  %s6 = scalar_select 0, %s5, %s3
  $region1: #{tpu_custom_call.1} parent=0
    #allocation2 [shape = 'u8[8192]{0}', space=vmem, size = 0x2000, scoped, tag = 'input window, operand 0, single buffered']
    #allocation3 [shape = 's32[1]{0}', space=sflag, size = 0x4, scoped, tag = 'scoped memory for tpu_custom_call.1']
    #allocation4 [shape = 's32[1]{0}', space=sflag, size = 0x4, scoped, tag = 'scoped memory for tpu_custom_call.1']
    #allocation5 [shape = 'u8[8192]{0}', space=vmem, size = 0x2000, scoped, tag = 'input window, operand 1, single buffered']
    #allocation6 [shape = 's32[1]{0}', space=sflag, size = 0x4, scoped, tag = 'scoped memory for tpu_custom_call.1']
    #allocation7 [shape = 'u8[4096]{0}', space=vmem, size = 0x1000, scoped, tag = 'output window, operand 0, single buffered']
    %7 = vsyncpa [#allocation3], 0
    %8 = vsyncpa [#allocation6], 0
    %9 = vsyncpa [#allocation4], 0
    // Predicated region
    $region2: #{tpu_custom_call.1} parent=1 // pred_check
      _
    $region3: #{tpu_custom_call.1} parent=1 // pred_check_branch
      %11 = sbr.rel (0) target = $region5
    $region4: #{tpu_custom_call.1} parent=1 // pred_region
      %s12 = sadd.s32 0, 0
      %s13 = smul.u32 2, %s12
      %s15 = ssub.s32 256, 256
      %16 = vsyncadd [#allocation3], %s15
      %s17 = smul.addr %s13, 128
      %s18 = scalar_lea.hbm %s0, %s17
      %s19 = sshll.u32 [#allocation2], 4
      %s20 = int_to_ptr.vmem [resolvable:$true] %s19
      %25 = dma.hbm_to_vmem [thread:$0]  %s18, 256, %s20, [#allocation3], 128, 128, 8
    $region5: #{tpu_custom_call.1} parent=1 // pred_fallthru
      _
    // Predicated region
    $region6: #{tpu_custom_call.1} parent=1 // pred_check
      _
    $region7: #{tpu_custom_call.1} parent=1 // pred_check_branch
      %27 = sbr.rel (0) target = $region9
    $region8: #{tpu_custom_call.1} parent=1 // pred_region
      %s28 = sadd.s32 0, 0
      %s29 = smul.u32 2, %s28
      %s31 = ssub.s32 256, 256
      %32 = vsyncadd [#allocation6], %s31
      %s33 = smul.addr %s29, 128
      %s34 = scalar_lea.hbm %s1, %s33
      %s35 = sshll.u32 [#allocation5], 4
      %s36 = int_to_ptr.vmem [resolvable:$true] %s35
      %41 = dma.hbm_to_vmem [thread:$0]  %s34, 256, %s36, [#allocation6], 128, 128, 8
    $region9: #{tpu_custom_call.1} parent=1 // pred_fallthru
      _
    // Predicated region
    $region10: #{tpu_custom_call.1} parent=1 // pred_check
      _
    $region11: #{tpu_custom_call.1} parent=1 // pred_check_branch
      %43 = sbr.rel (0) target = $region13
    $region12: #{tpu_custom_call.1} parent=1 // pred_region
      %44 = dma.done [#allocation3], 256
    $region13: #{tpu_custom_call.1} parent=1 // pred_fallthru
      _
    // Predicated region
    $region14: #{tpu_custom_call.1} parent=1 // pred_check
      _
    $region15: #{tpu_custom_call.1} parent=1 // pred_check_branch
      %46 = sbr.rel (0) target = $region17
    $region16: #{tpu_custom_call.1} parent=1 // pred_region
      %47 = dma.done [#allocation6], 256
    $region17: #{tpu_custom_call.1} parent=1 // pred_fallthru
      _
    %s48 = sadd.s32 0, 0
    %s49 = smul.u32 2, %s48
    %s50 = sadd.s32 0, 0
    %s51 = smul.u32 2, %s50
    %p52 = scmp.eq.s32.totalorder 0, 0
    // Predicated region
    $region18: #{tpu_custom_call.1} parent=1 // pred_check
      %p53 = pneg %p52
    $region19: #{tpu_custom_call.1} parent=1 // pred_check_branch
      %55 = sbr.rel (%p53) target = $region21
    $region20: #{tpu_custom_call.1} parent=1 // pred_region
      %56 = vst [vmem:[#allocation7] sm:$0xff] 0.0
    $region21: #{tpu_custom_call.1} parent=1 // pred_fallthru
      _
    %v57 = vld [vmem:[#allocation2] sm:$0xff]
    %v58 = vld [vmem:[#allocation2 + $0x8] sm:$0xff]
    %v59 = vld [vmem:[#allocation5] sm:$0xff]
    %v60 = vld [vmem:[#allocation5 + $0x8] sm:$0xff]
    %v61 = vmax.f32 %v57, 0.0
    %v62 = vmax.f32 %v58, 0.0
    %v63 = vmul.f32 %v57, %v59
    %v64 = vmul.f32 %v58, %v60
    %v65 = vsub.f32 %v61, %v63
    %v66 = vsub.f32 %v62, %v64
    %v67 = vand.u32 2147483647, %v57
    %v68 = vand.u32 2147483647, %v58
    %v69 = vsub.f32 0.0, %v67
    %v70 = vsub.f32 0.0, %v68
    %v71 = vmul.f32 %v69, 1.442695
    %v72 = vpow.pop %v71
    %v73 = vmul.f32 %v70, 1.442695
    %v74 = vpow.pop %v73
    %v75 = vadd.f32 %v72, 1.0
    %v76 = vlog2.pop %v75
    %v77 = vmul.f32 %v76, 0.6931472
    %v78 = vmul.f32 -0.5, %v72
    %v79 = vadd.f32 %v78, 1.0
    %v80 = vmul.f32 %v79, %v72
    %v81 = vand.u32 2147483647, %v72
    %vm82 = vcmp.lt.f32.partialorder %v81, 0.0004427343
    %v83 = vsel %vm82, %v80, %v77
    %v84 = vadd.f32 %v74, 1.0
    %v85 = vlog2.pop %v84
    %v86 = vmul.f32 %v85, 0.6931472
    %v87 = vmul.f32 -0.5, %v74
    %v88 = vadd.f32 %v87, 1.0
    %v89 = vmul.f32 %v88, %v74
    %v90 = vand.u32 2147483647, %v74
    %vm91 = vcmp.lt.f32.partialorder %v90, 0.0004427343
    %v92 = vsel %vm91, %v89, %v86
    %v93 = vadd.f32 %v65, %v83
    %v94 = vadd.f32 %v66, %v92
    %v95 = vsub.f32 0.0, %v93
    %v96 = vsub.f32 0.0, %v94
    %v97 = vmul.f32 %v95, 1.442695
    %v98 = vpow.pop %v97
    %v99 = vmul.f32 %v96, 1.442695
    %v100 = vpow.pop %v99
    %v101 = vsub.f32 1.000001, %v98
    %v102 = vsub.f32 1.000001, %v100
    %v103 = vrsqrt.pop %v101
    %v104 = vmul.f32 %v101, %v103
    %vm105 = vcmp.eq.f32.partialorder %v101, inf
    %v106 = vsel %vm105, %v101, %v104
    %vm107 = vcmp.eq.f32.partialorder %v101, 0.0
    %v108 = vand.u32 %v101, 2147483648
    %v109 = vsel %vm107, %v108, %v106
    %v110 = vrsqrt.pop %v102
    %v111 = vmul.f32 %v102, %v110
    %vm112 = vcmp.eq.f32.partialorder %v102, inf
    %v113 = vsel %vm112, %v102, %v111
    %vm114 = vcmp.eq.f32.partialorder %v102, 0.0
    %v115 = vand.u32 %v102, 2147483648
    %v116 = vsel %vm114, %v115, %v113
    %v117 = vmul.f32 %v93, %v109
    %v118 = vmul.f32 %v94, %v116
    %v119 = vld [vmem:[#allocation7] sm:$0xff]
    %v120 = vadd.f32 %v117, %v118
    %v121 = vadd.f32 %v119, %v120
    %122 = vst [vmem:[#allocation7] sm:$0xff] %v121
    // Predicated region
    $region22: #{tpu_custom_call.1} parent=1 // pred_check
      _
    $region23: #{tpu_custom_call.1} parent=1 // pred_check_branch
      %124 = sbr.rel (0) target = $region25
    $region24: #{tpu_custom_call.1} parent=1 // pred_region
      %s126 = ssub.s32 128, 128
      %127 = vsyncadd [#allocation4], %s126
      %s129 = sshll.u32 [#allocation7], 4
      %s130 = int_to_ptr.vmem [resolvable:$true] %s129
      %132 = dma.vmem_to_hbm [thread:$0]  %s130, 128, %s2, [#allocation4]
    $region25: #{tpu_custom_call.1} parent=1 // pred_fallthru
      _
    // Predicated region
    $region26: #{tpu_custom_call.1} parent=1 // pred_check
      _
    $region27: #{tpu_custom_call.1} parent=1 // pred_check_branch
      %134 = sbr.rel (0) target = $region29
    $region28: #{tpu_custom_call.1} parent=1 // pred_region
      %135 = dma.done [#allocation4], 128
    $region29: #{tpu_custom_call.1} parent=1 // pred_fallthru
      _
    %136 = vsyncpa [#allocation3], 1
    %137 = vsyncpa [#allocation6], 1
    %138 = vsyncpa [#allocation4], 1

</llo_original>
